<compile_context>
chip_gen: v7x
topology: tpu7x:2x2x1
jax: 0.10.0
libtpu: 0.0.40
codegen_flags: <defaults>
</compile_context>

<pallas_src>
import functools
from typing import NamedTuple

import jax
import jax.numpy as jnp
from jax import lax
from jax.experimental import pallas as pl
from jax.experimental.pallas import tpu as pltpu


def _round_up(x, m):
    return (x + m - 1) // m * m


class HeadMeta(NamedTuple):
    hid_dim: int
    num_answers: int
    a_pad: int
    tn: int
    n_splits: int
    tiles_per_split: int


# -----------------------------------------------------------------------------
# One-time weight preparation (cast to bf16, pad, per-tile contiguous layout).
# Call this ONCE at model init, not per forward pass.
# -----------------------------------------------------------------------------
def prepare_head_params(w1, b1, gamma, beta, w2, b2, *, tn_max=1024,
                        n_splits=2):
    H, H2 = w1.shape          # H, 2H
    A = w2.shape[1]           # num_answers

    # Accept (D,) or (1, D) vectors from checkpoints.
    b1 = jnp.reshape(b1, (1, H2)).astype(jnp.float32)
    gamma = jnp.reshape(gamma, (1, H2)).astype(jnp.float32)
    beta = jnp.reshape(beta, (1, H2)).astype(jnp.float32)

    # Answers padded to a multiple of 128 (lane-dense stores), then to a
    # multiple of n_splits * TN so the answer tiles split evenly across cores.
    A_pad = _round_up(A, 128)
    TN = min(tn_max, A_pad)
    n_tiles = pl.cdiv(A_pad, TN)
    NC = n_splits if n_tiles >= n_splits else 1
    A_pad = _round_up(A_pad, NC * TN)
    n_tiles = A_pad // TN
    tps = n_tiles // NC

    w1_b = w1.astype(jnp.bfloat16)                                  # (H, 2H)
    w2_p = jnp.zeros((H2, A_pad), jnp.bfloat16).at[:, :A].set(
        w2.astype(jnp.bfloat16))
    # Contiguous per-tile layout: (n_tiles, 2H, TN).
    w2_tiles = w2_p.reshape(H2, n_tiles, TN).transpose(1, 0, 2)
    b2_p = jnp.zeros((1, A_pad), jnp.float32).at[:, :A].set(
        jnp.reshape(b2, (1, A)).astype(jnp.float32))

    params = (w1_b, b1, gamma, beta, w2_tiles, b2_p)
    meta = HeadMeta(H, A, A_pad, TN, NC, tps)
    return params, meta


# -----------------------------------------------------------------------------
# Pallas kernel: fused logit_fc head.
#   Grid = (n_splits, tiles_per_split); inner axis walks answer tiles.
#   h = LN(GeLU(pooled @ w1 + b1)) computed once per split (pl.when j==0),
#   cached in VMEM as bf16, reused for every w2 answer tile.
# -----------------------------------------------------------------------------
def _logit_fc_kernel(pooled_ref, w1_ref, b1_ref, gamma_ref, beta_ref,
                     w2_ref, b2_ref, out_ref, h_ref):
    @pl.when(pl.program_id(1) == 0)
    def _():
        # ---- Linear 1: bf16 operands, f32 accumulation on the MXU ----------
        h = jnp.dot(pooled_ref[...], w1_ref[...],
                    preferred_element_type=jnp.float32)        # (Bp, 2H) f32
        h = h + b1_ref[...]
        # ---- GeLU (exact erf — matches LXMERT's GeLU), f32 ------------------
        h = h * 0.5 * (1.0 + lax.erf(h * jnp.float32(0.7071067811865476)))
        # ---- BertLayerNorm over last dim, eps=1e-12, f32 --------------------
        mu = jnp.mean(h, axis=-1, keepdims=True)
        d = h - mu
        var = jnp.mean(d * d, axis=-1, keepdims=True)
        h = d * lax.rsqrt(var + jnp.float32(1e-12))
        h = h * gamma_ref[...] + beta_ref[...]
        # Cache already cast to bf16 for matmul 2.
        h_ref[...] = h.astype(jnp.bfloat16)

    # ---- Linear 2 on this answer tile: bf16 x bf16 -> f32 -------------------
    logits = jnp.dot(h_ref[...], w2_ref[...],
                     preferred_element_type=jnp.float32)       # (Bp, TN)
    out_ref[...] = logits + b2_ref[...]


@functools.partial(jax.jit, static_argnames=("meta",))
def logit_fc_pallas(pooled, params, *, meta):
    """Fused classifier head. pooled: (B, H) f32 -> (B, num_answers) f32."""
    w1_b, b1, gamma, beta, w2_tiles, b2_p = params
    B, H = pooled.shape
    H2 = w1_b.shape[1]
    A_pad, TN = meta.a_pad, meta.tn
    NC, tps = meta.n_splits, meta.tiles_per_split

    # Per-call activation prep only (tiny): pad batch to a multiple of 16
    # (bf16 sublane packing) and cast to bf16.
    B_pad = max(_round_up(B, 16), 16)
    pooled_p = jnp.zeros((B_pad, H), jnp.bfloat16).at[:B, :].set(
        pooled.astype(jnp.bfloat16))

    cost = pl.CostEstimate(
        flops=2 * B_pad * H * H2 * NC + 2 * B_pad * H2 * A_pad,
        transcendentals=B_pad * H2 * NC,
        bytes_accessed=((pooled_p.size + w1_b.size) * 2 * NC
                        + (b1.size + gamma.size + beta.size) * 4 * NC
                        + w2_tiles.size * 2 + b2_p.size * 4
                        + B_pad * A_pad * 4),
    )

    out = pl.pallas_call(
        _logit_fc_kernel,
        out_shape=jax.ShapeDtypeStruct((B_pad, A_pad), jnp.float32),
        grid_spec=pltpu.PrefetchScalarGridSpec(
            num_scalar_prefetch=0,
            grid=(NC, tps),
            in_specs=[
                pl.BlockSpec((B_pad, H), lambda c, j: (0, 0)),   # pooled bf16
                pl.BlockSpec((H, H2), lambda c, j: (0, 0)),      # w1     bf16
                pl.BlockSpec((1, H2), lambda c, j: (0, 0)),      # b1     f32
                pl.BlockSpec((1, H2), lambda c, j: (0, 0)),      # gamma  f32
                pl.BlockSpec((1, H2), lambda c, j: (0, 0)),      # beta   f32
                # Contiguous per-tile w2 blocks (leading tile dim squeezed).
                pl.BlockSpec((None, H2, TN),
                             lambda c, j: (c * tps + j, 0, 0)),  # w2 tile
                pl.BlockSpec((1, TN),
                             lambda c, j: (0, c * tps + j)),     # b2 tile
            ],
            out_specs=pl.BlockSpec((B_pad, TN),
                                   lambda c, j: (0, c * tps + j)),
            scratch_shapes=[pltpu.VMEM((B_pad, H2), jnp.bfloat16)],  # cached h
        ),
        compiler_params=pltpu.CompilerParams(
            dimension_semantics=("parallel", "arbitrary"),
            vmem_limit_bytes=32 * 1024 * 1024),
        cost_estimate=cost,
    )(pooled_p, w1_b, b1, gamma, beta, w2_tiles, b2_p)

    return out[:B, :meta.num_answers]


# -----------------------------------------------------------------------------
# Deterministic parameter init (BERT-style: N(0, 0.02) weights, zero biases,
# LayerNorm gamma=1 / beta=0), matching init_bert_weights applied to logit_fc.
# -----------------------------------------------------------------------------
def init_gqa_head_params(key, hid_dim, num_answers):
    k1, k2 = jax.random.split(key)
    w1 = 0.02 * jax.random.normal(k1, (hid_dim, 2 * hid_dim), jnp.float32)
    b1 = jnp.zeros((2 * hid_dim,), jnp.float32)
    gamma = jnp.ones((2 * hid_dim,), jnp.float32)
    beta = jnp.zeros((2 * hid_dim,), jnp.float32)
    w2 = 0.02 * jax.random.normal(k2, (2 * hid_dim, num_answers), jnp.float32)
    b2 = jnp.zeros((num_answers,), jnp.float32)
    return w1, b1, gamma, beta, w2, b2


# -----------------------------------------------------------------------------
# Stand-in "LXRT encoder": deterministic plain-JAX glue mapping the raw
# GQAModel inputs (vis_feat, vis_pos, tokenized sent / sem_queries) to a
# pooled_output of shape (B, hid_dim).  NOT the real LXMERT encoder.
# -----------------------------------------------------------------------------
def standin_lxrt_encoder(key, vis_feat, vis_pos, sent_ids, sem_ids, hid_dim,
                         vocab_size=30522):
    kf, kp, ke, kpool = jax.random.split(key, 4)
    B, O, F = vis_feat.shape

    w_feat = 0.02 * jax.random.normal(kf, (F, hid_dim), jnp.float32)
    w_pos = 0.02 * jax.random.normal(kp, (4, hid_dim), jnp.float32)
    emb = 0.02 * jax.random.normal(ke, (vocab_size, hid_dim), jnp.float32)
    w_pool = 0.02 * jax.random.normal(kpool, (hid_dim, hid_dim), jnp.float32)

    visn = jnp.mean(vis_feat @ w_feat + vis_pos @ w_pos, axis=1)      # (B, H)
    lang = jnp.mean(emb[sent_ids], axis=1)                            # (B, H)
    sem = jnp.mean(emb[sem_ids], axis=1)                              # (B, H)
    pooled = jnp.tanh((visn + lang + sem) @ w_pool)                   # (B, H)
    return pooled


# -----------------------------------------------------------------------------
# Full GQAModel.forward (task_nsp_qfpm = task_mlm_qfpm = False path)
# -----------------------------------------------------------------------------
def gqa_model_forward(prepared_params, meta, enc_key, vis_feat, vis_pos,
                      sent_ids, sem_ids, hid_dim):
    pooled = standin_lxrt_encoder(enc_key, vis_feat, vis_pos, sent_ids,
                                  sem_ids, hid_dim)
    return logit_fc_pallas(pooled, prepared_params, meta=meta)


# -----------------------------------------------------------------------------
# Pure-JAX reference for the Pallas head (same bf16-input / f32-accum path)
# -----------------------------------------------------------------------------
def logit_fc_ref(pooled, w1, b1, gamma, beta, w2, b2):
    h = jnp.dot(pooled.astype(jnp.bfloat16), w1.astype(jnp.bfloat16),
                preferred_element_type=jnp.float32) + b1.reshape(1, -1)
    h = h * 0.5 * (1.0 + jax.scipy.special.erf(
        h * jnp.float32(0.7071067811865476)))
    mu = jnp.mean(h, axis=-1, keepdims=True)
    var = jnp.mean((h - mu) ** 2, axis=-1, keepdims=True)
    h = (h - mu) * lax.rsqrt(var + 1e-12) * gamma.reshape(1, -1) \
        + beta.reshape(1, -1)
    return jnp.dot(h.astype(jnp.bfloat16), w2.astype(jnp.bfloat16),
                   preferred_element_type=jnp.float32) + b2.reshape(1, -1)


if __name__ == "__main__":
    # Small shapes consistent with the GQAModel forward signature:
    #   vis_feat: (b, o, f), vis_pos: (b, o, 4), sent / sem_queries: (b, seq)
    B, O, F = 2, 8, 64          # batch, objects, visual feature size
    SEQ = 8                     # tokenized sentence length (MAX_GQA_LENGTH=100 real)
    HID = 32                    # lxrt_encoder.dim (768 in the real model)
    NUM_ANSWERS = 16

    root = jax.random.PRNGKey(0)
    k_in, k_enc, k_head = jax.random.split(root, 3)
    k_vf, k_vp, k_s, k_q = jax.random.split(k_in, 4)

    vis_feat = jax.random.normal(k_vf, (B, O, F), jnp.float32)
    vis_pos = jax.random.uniform(k_vp, (B, O, 4), jnp.float32)
    sent_ids = jax.random.randint(k_s, (B, SEQ), 0, 30522, jnp.int32)
    sem_ids = jax.random.randint(k_q, (B, SEQ), 0, 30522, jnp.int32)

    raw_params = init_gqa_head_params(k_head, HID, NUM_ANSWERS)
    # One-time weight prep (cast/pad/tile) — hoisted out of the call path.
    prepared, meta = prepare_head_params(*raw_params)

    logits = gqa_model_forward(prepared, meta, k_enc, vis_feat, vis_pos,
                               sent_ids, sem_ids, HID)
    logits = jax.block_until_ready(logits)
    assert logits.shape == (B, NUM_ANSWERS)

    # Verify the Pallas head against the pure-JAX reference (same bf16 path).
    pooled = standin_lxrt_encoder(k_enc, vis_feat, vis_pos, sent_ids,
                                  sem_ids, HID)
    ref = logit_fc_ref(pooled, *raw_params)
    assert jnp.allclose(logits, ref, atol=5e-3, rtol=5e-3), (
        "Pallas head mismatch vs reference (single-tile path)")

    # Second check: exercise the multi-tile / multi-split path
    # (2-D grid, cached h reused across answer tiles).
    NUM_ANSWERS2 = 300
    raw_params2 = init_gqa_head_params(k_head, HID, NUM_ANSWERS2)
    prepared2, meta2 = prepare_head_params(*raw_params2, tn_max=128)
    assert meta2.n_splits == 2 and meta2.tiles_per_split >= 2
    logits2 = logit_fc_pallas(pooled, prepared2, meta=meta2)
    logits2 = jax.block_until_ready(logits2)
    ref2 = logit_fc_ref(pooled, *raw_params2)
    assert logits2.shape == (B, NUM_ANSWERS2)
    assert jnp.allclose(logits2, ref2, atol=5e-3, rtol=5e-3), (
        "Pallas head mismatch vs reference (tiled path)")

    print("KERNEL_OK")
</pallas_src>

<mosaic_0001>
module attributes {stable_mosaic.version = 11 : i64} {
  func.func @_logit_fc_kernel(%arg0: i32, %arg1: i32, %arg2: memref<16x32xbf16, #tpu.memory_space<vmem>>, %arg3: memref<32x64xbf16, #tpu.memory_space<vmem>>, %arg4: memref<1x64xf32, #tpu.memory_space<vmem>>, %arg5: memref<1x64xf32, #tpu.memory_space<vmem>>, %arg6: memref<1x64xf32, #tpu.memory_space<vmem>>, %arg7: memref<1x64x128xbf16, #tpu.memory_space<vmem>>, %arg8: memref<1x128xf32, #tpu.memory_space<vmem>>, %arg9: memref<16x128xf32, #tpu.memory_space<vmem>>, %arg10: memref<16x64xbf16, #tpu.memory_space<vmem>>) attributes {dimension_semantics = [#tpu.dimension_semantics<parallel>, #tpu.dimension_semantics<arbitrary>], iteration_bounds = array<i64: 1, 1>, scalar_prefetch = 0 : i64, scratch_operands = 1 : i64, tpu.core_type = #tpu.core_type<tc>, window_params = [{pipeline_mode = #tpu.pipeline_mode<synchronous>, transform_indices = @transform_0, window_bounds = array<i64: 16, 32>}, {pipeline_mode = #tpu.pipeline_mode<synchronous>, transform_indices = @transform_1, window_bounds = array<i64: 32, 64>}, {pipeline_mode = #tpu.pipeline_mode<synchronous>, transform_indices = @transform_2, window_bounds = array<i64: 1, 64>}, {pipeline_mode = #tpu.pipeline_mode<synchronous>, transform_indices = @transform_3, window_bounds = array<i64: 1, 64>}, {pipeline_mode = #tpu.pipeline_mode<synchronous>, transform_indices = @transform_4, window_bounds = array<i64: 1, 64>}, {transform_indices = @transform_5, window_bounds = array<i64: 1, 64, 128>}, {transform_indices = @transform_6, window_bounds = array<i64: 1, 128>}, {transform_indices = @transform_7, window_bounds = array<i64: 16, 128>}]} {
    %c0_i32 = arith.constant 0 : i32
    %0 = arith.cmpi eq, %arg1, %c0_i32 : i32
    %1 = arith.extui %0 : i1 to i32
    %c0_i32_0 = arith.constant 0 : i32
    %2 = arith.cmpi ne, %1, %c0_i32_0 : i32
    scf.if %2 {
      %c0_9 = arith.constant 0 : index
      %c0_10 = arith.constant 0 : index
      %11 = vector.load %arg2[%c0_9, %c0_10] : memref<16x32xbf16, #tpu.memory_space<vmem>>, vector<16x32xbf16>
      %c0_11 = arith.constant 0 : index
      %c0_12 = arith.constant 0 : index
      %12 = vector.load %arg3[%c0_11, %c0_12] : memref<32x64xbf16, #tpu.memory_space<vmem>>, vector<32x64xbf16>
      %cst_13 = arith.constant dense<0.000000e+00> : vector<16x64xf32>
      %13 = tpu.matmul %11, %12, %cst_13 {dimension_numbers = #tpu.dot_dimension_numbers<[1], [0], [0], [1], [0, 0, 1, 1], [], []>} : vector<16x32xbf16>, vector<32x64xbf16>, vector<16x64xf32> -> vector<16x64xf32>
      %c0_14 = arith.constant 0 : index
      %c0_15 = arith.constant 0 : index
      %14 = vector.load %arg4[%c0_14, %c0_15] : memref<1x64xf32, #tpu.memory_space<vmem>>, vector<1x64xf32>
      %15 = vector.broadcast %14 : vector<1x64xf32> to vector<16x64xf32>
      %16 = arith.addf %13, %15 : vector<16x64xf32>
      %cst_16 = arith.constant 5.000000e-01 : f32
      %17 = vector.broadcast %cst_16 : f32 to vector<16x64xf32>
      %18 = arith.mulf %16, %17 : vector<16x64xf32>
      %cst_17 = arith.constant 0.707106769 : f32
      %19 = vector.broadcast %cst_17 : f32 to vector<16x64xf32>
      %20 = arith.mulf %16, %19 : vector<16x64xf32>
      %21 = math.erf %20 : vector<16x64xf32>
      %cst_18 = arith.constant 1.000000e+00 : f32
      %22 = vector.broadcast %cst_18 : f32 to vector<16x64xf32>
      %23 = arith.addf %22, %21 : vector<16x64xf32>
      %24 = arith.mulf %18, %23 : vector<16x64xf32>
      %cst_19 = arith.constant dense<0.000000e+00> : vector<16xf32>
      %25 = vector.multi_reduction <add>, %24, %cst_19 [1] : vector<16x64xf32> to vector<16xf32>
      %26 = vector.shape_cast %25 : vector<16xf32> to vector<16x1xf32>
      %cst_20 = arith.constant 6.400000e+01 : f32
      %27 = vector.broadcast %cst_20 : f32 to vector<16x1xf32>
      %28 = arith.divf %26, %27 : vector<16x1xf32>
      %29 = vector.broadcast %28 : vector<16x1xf32> to vector<16x64xf32>
      %30 = arith.subf %24, %29 : vector<16x64xf32>
      %31 = arith.mulf %30, %30 : vector<16x64xf32>
      %cst_21 = arith.constant dense<0.000000e+00> : vector<16xf32>
      %32 = vector.multi_reduction <add>, %31, %cst_21 [1] : vector<16x64xf32> to vector<16xf32>
      %33 = vector.shape_cast %32 : vector<16xf32> to vector<16x1xf32>
      %cst_22 = arith.constant 6.400000e+01 : f32
      %34 = vector.broadcast %cst_22 : f32 to vector<16x1xf32>
      %35 = arith.divf %33, %34 : vector<16x1xf32>
      %cst_23 = arith.constant 9.99999996E-13 : f32
      %36 = vector.broadcast %cst_23 : f32 to vector<16x1xf32>
      %37 = arith.addf %35, %36 : vector<16x1xf32>
      %38 = math.rsqrt %37 : vector<16x1xf32>
      %39 = vector.broadcast %38 : vector<16x1xf32> to vector<16x64xf32>
      %40 = arith.mulf %30, %39 : vector<16x64xf32>
      %c0_24 = arith.constant 0 : index
      %c0_25 = arith.constant 0 : index
      %41 = vector.load %arg5[%c0_24, %c0_25] : memref<1x64xf32, #tpu.memory_space<vmem>>, vector<1x64xf32>
      %42 = vector.broadcast %41 : vector<1x64xf32> to vector<16x64xf32>
      %43 = arith.mulf %40, %42 : vector<16x64xf32>
      %c0_26 = arith.constant 0 : index
      %c0_27 = arith.constant 0 : index
      %44 = vector.load %arg6[%c0_26, %c0_27] : memref<1x64xf32, #tpu.memory_space<vmem>>, vector<1x64xf32>
      %45 = vector.broadcast %44 : vector<1x64xf32> to vector<16x64xf32>
      %46 = arith.addf %43, %45 : vector<16x64xf32>
      %47 = arith.truncf %46 : vector<16x64xf32> to vector<16x64xbf16>
      %c0_28 = arith.constant 0 : index
      %c0_29 = arith.constant 0 : index
      %48 = vector.load %arg10[%c0_28, %c0_29] : memref<16x64xbf16, #tpu.memory_space<vmem>>, vector<16x64xbf16>
      tpu.vector_store %arg10[%c0_28, %c0_29], %47 {strides = array<i32>} : memref<16x64xbf16, #tpu.memory_space<vmem>>, vector<16x64xbf16>,
    } else {
    }
    %c0 = arith.constant 0 : index
    %c0_1 = arith.constant 0 : index
    %3 = vector.load %arg10[%c0, %c0_1] : memref<16x64xbf16, #tpu.memory_space<vmem>>, vector<16x64xbf16>
    %c0_2 = arith.constant 0 : index
    %c0_3 = arith.constant 0 : index
    %c0_4 = arith.constant 0 : index
    %4 = vector.load %arg7[%c0_2, %c0_3, %c0_4] : memref<1x64x128xbf16, #tpu.memory_space<vmem>>, vector<1x64x128xbf16>
    %5 = vector.shape_cast %4 : vector<1x64x128xbf16> to vector<64x128xbf16>
    %cst = arith.constant dense<0.000000e+00> : vector<16x128xf32>
    %6 = tpu.matmul %3, %5, %cst {dimension_numbers = #tpu.dot_dimension_numbers<[1], [0], [0], [1], [0, 0, 1, 1], [], []>} : vector<16x64xbf16>, vector<64x128xbf16>, vector<16x128xf32> -> vector<16x128xf32>
    %c0_5 = arith.constant 0 : index
    %c0_6 = arith.constant 0 : index
    %7 = vector.load %arg8[%c0_5, %c0_6] : memref<1x128xf32, #tpu.memory_space<vmem>>, vector<1x128xf32>
    %8 = vector.broadcast %7 : vector<1x128xf32> to vector<16x128xf32>
    %9 = arith.addf %6, %8 : vector<16x128xf32>
    %c0_7 = arith.constant 0 : index
    %c0_8 = arith.constant 0 : index
    %10 = vector.load %arg9[%c0_7, %c0_8] : memref<16x128xf32, #tpu.memory_space<vmem>>, vector<16x128xf32>
    tpu.vector_store %arg9[%c0_7, %c0_8], %9 {strides = array<i32>} : memref<16x128xf32, #tpu.memory_space<vmem>>, vector<16x128xf32>,
    return
  }
  func.func @transform_0(%arg0: i32, %arg1: i32) -> (i32, i32) {
    %c0_i32 = arith.constant 0 : i32
    %c0_i32_0 = arith.constant 0 : i32
    %c0_i32_1 = arith.constant 0 : i32
    return %c0_i32, %c0_i32_0 : i32, i32
  }
  func.func @transform_1(%arg0: i32, %arg1: i32) -> (i32, i32) {
    %c0_i32 = arith.constant 0 : i32
    %c0_i32_0 = arith.constant 0 : i32
    %c0_i32_1 = arith.constant 0 : i32
    return %c0_i32, %c0_i32_0 : i32, i32
  }
  func.func @transform_2(%arg0: i32, %arg1: i32) -> (i32, i32) {
    %c0_i32 = arith.constant 0 : i32
    %c0_i32_0 = arith.constant 0 : i32
    %c0_i32_1 = arith.constant 0 : i32
    return %c0_i32, %c0_i32_0 : i32, i32
  }
  func.func @transform_3(%arg0: i32, %arg1: i32) -> (i32, i32) {
    %c0_i32 = arith.constant 0 : i32
    %c0_i32_0 = arith.constant 0 : i32
    %c0_i32_1 = arith.constant 0 : i32
    return %c0_i32, %c0_i32_0 : i32, i32
  }
  func.func @transform_4(%arg0: i32, %arg1: i32) -> (i32, i32) {
    %c0_i32 = arith.constant 0 : i32
    %c0_i32_0 = arith.constant 0 : i32
    %c0_i32_1 = arith.constant 0 : i32
    return %c0_i32, %c0_i32_0 : i32, i32
  }
  func.func @transform_5(%arg0: i32, %arg1: i32) -> (i32, i32, i32) {
    %c1_i32 = arith.constant 1 : i32
    %0 = arith.muli %arg0, %c1_i32 : i32
    %1 = arith.addi %0, %arg1 : i32
    %c0_i32 = arith.constant 0 : i32
    %c0_i32_0 = arith.constant 0 : i32
    %c0_i32_1 = arith.constant 0 : i32
    return %1, %c0_i32, %c0_i32_0 : i32, i32, i32
  }
  func.func @transform_6(%arg0: i32, %arg1: i32) -> (i32, i32) {
    %c1_i32 = arith.constant 1 : i32
    %0 = arith.muli %arg0, %c1_i32 : i32
    %1 = arith.addi %0, %arg1 : i32
    %c0_i32 = arith.constant 0 : i32
    %c0_i32_0 = arith.constant 0 : i32
    return %c0_i32, %1 : i32, i32
  }
  func.func @transform_7(%arg0: i32, %arg1: i32) -> (i32, i32) {
    %c1_i32 = arith.constant 1 : i32
    %0 = arith.muli %arg0, %c1_i32 : i32
    %1 = arith.addi %0, %arg1 : i32
    %c0_i32 = arith.constant 0 : i32
    %c0_i32_0 = arith.constant 0 : i32
    return %c0_i32, %1 : i32, i32
  }
}

</mosaic_0001>

<llo_original>
// kernel: logit_fc_pallas.1
$region0: #{logit_fc_pallas.1}
  #allocation0 [shape = 'u32[]', space=smem, size = 0x4, offset = 0x4, fixed_abs, tag = 'smem constant byte address 0x4 - core index']
  #allocation1 [shape = 'u32[144,128]{1,0:T(1,128)}', space=vmem, size = 0x12000, scoped, tag = 'internal scratch']
  #allocation2 [shape = 'bf16[16,64]{1,0:T(16,128)(2,1)}', space=vmem, size = 0x1000, scoped, tag = 'scratch operand']
  %s0 = inlined_call_operand.vmem [shape: bf16[16,32], index: 0, kind: input, shape index: {}]
  %s1 = inlined_call_operand.hbm [shape: bf16[32,64], index: 1, kind: input, shape index: {}]
  %s2 = inlined_call_operand.hbm [shape: f32[1,64], index: 2, kind: input, shape index: {}]
  %s3 = inlined_call_operand.hbm [shape: f32[1,64], index: 3, kind: input, shape index: {}]
  %s4 = inlined_call_operand.hbm [shape: f32[1,64], index: 4, kind: input, shape index: {}]
  %s5 = inlined_call_operand.vmem [shape: bf16[1,64,128], index: 5, kind: input, shape index: {}]
  %s6 = inlined_call_operand.vmem [shape: f32[1,128], index: 6, kind: input, shape index: {}]
  %s7 = inlined_call_operand.vmem [shape: f32[16,128], index: 7, kind: output, shape index: {}]
  %s8 = sld [smem:[#allocation0]]
  $region58: #{logit_fc_pallas.1} parent=0
    _
  %s10 = ssub.s32 1, %s8
  %s11 = scalar_select 0, %s10, %s8
  $region1: #{logit_fc_pallas.1} parent=0
    #allocation3 [shape = 'u8[8192]{0}', space=vmem, size = 0x2000, scoped, tag = 'input window, operand 1, single buffered']
    #allocation4 [shape = 's32[1]{0}', space=sflag, size = 0x4, scoped, tag = 'scoped memory for logit_fc_pallas.1']
    #allocation5 [shape = 'u8[512]{0}', space=vmem, size = 0x400, scoped, tag = 'input window, operand 2, single buffered']
    #allocation6 [shape = 's32[1]{0}', space=sflag, size = 0x4, scoped, tag = 'scoped memory for logit_fc_pallas.1']
    #allocation7 [shape = 'u8[512]{0}', space=vmem, size = 0x400, scoped, tag = 'input window, operand 3, single buffered']
    #allocation8 [shape = 'u8[512]{0}', space=vmem, size = 0x400, scoped, tag = 'input window, operand 4, single buffered']
    #allocation9 [shape = 's32[1]{0}', space=sflag, size = 0x4, scoped, tag = 'scoped memory for logit_fc_pallas.1']
    %12 = vsyncpa [#allocation4], 0
    %13 = vsyncpa [#allocation6], 0
    %14 = vsyncpa [#allocation9], 0
    // Predicated region
    $region2: #{logit_fc_pallas.1} parent=1 // pred_check
      _
    $region3: #{logit_fc_pallas.1} parent=1 // pred_check_branch
      %16 = sbr.rel (0) target = $region5
    $region4: #{logit_fc_pallas.1} parent=1 // pred_region
      _
    $region5: #{logit_fc_pallas.1} parent=1 // pred_fallthru
      _
    // Predicated region
    $region6: #{logit_fc_pallas.1} parent=1 // pred_check
      _
    $region7: #{logit_fc_pallas.1} parent=1 // pred_check_branch
      %18 = sbr.rel (0) target = $region9
    $region8: #{logit_fc_pallas.1} parent=1 // pred_region
      %s20 = ssub.s32 256, 256
      %21 = vsyncadd [#allocation4], %s20
      %s22 = sshll.u32 [#allocation3], 4
      %s23 = int_to_ptr.vmem [resolvable:$true] %s22
      %28 = dma.hbm_to_vmem [thread:$0]  %s1, 256, %s23, [#allocation4], 64, 64, 4
    $region9: #{logit_fc_pallas.1} parent=1 // pred_fallthru
      _
    // Predicated region
    $region10: #{logit_fc_pallas.1} parent=1 // pred_check
      _
    $region11: #{logit_fc_pallas.1} parent=1 // pred_check_branch
      %30 = sbr.rel (0) target = $region13
    $region12: #{logit_fc_pallas.1} parent=1 // pred_region
      %s32 = ssub.s32 16, 16
      %33 = vsyncadd [#allocation6], %s32
      %s35 = sshll.u32 [#allocation5], 4
      %s36 = int_to_ptr.vmem [resolvable:$true] %s35
      %38 = dma.hbm_to_vmem [thread:$0]  %s2, 16, %s36, [#allocation6]
    $region13: #{logit_fc_pallas.1} parent=1 // pred_fallthru
      _
    // Predicated region
    $region14: #{logit_fc_pallas.1} parent=1 // pred_check
      _
    $region15: #{logit_fc_pallas.1} parent=1 // pred_check_branch
      %40 = sbr.rel (0) target = $region17
    $region16: #{logit_fc_pallas.1} parent=1 // pred_region
      %s42 = ssub.s32 16, 16
      %43 = vsyncadd [#allocation6], %s42
      %s45 = sshll.u32 [#allocation7], 4
      %s46 = int_to_ptr.vmem [resolvable:$true] %s45
      %48 = dma.hbm_to_vmem [thread:$0]  %s3, 16, %s46, [#allocation6]
    $region17: #{logit_fc_pallas.1} parent=1 // pred_fallthru
      _
    // Predicated region
    $region18: #{logit_fc_pallas.1} parent=1 // pred_check
      _
    $region19: #{logit_fc_pallas.1} parent=1 // pred_check_branch
      %50 = sbr.rel (0) target = $region21
    $region20: #{logit_fc_pallas.1} parent=1 // pred_region
      %s52 = ssub.s32 16, 16
      %53 = vsyncadd [#allocation9], %s52
      %s55 = sshll.u32 [#allocation8], 4
      %s56 = int_to_ptr.vmem [resolvable:$true] %s55
      %58 = dma.hbm_to_vmem [thread:$0]  %s4, 16, %s56, [#allocation9]
    $region21: #{logit_fc_pallas.1} parent=1 // pred_fallthru
      _
    // Predicated region
    $region22: #{logit_fc_pallas.1} parent=1 // pred_check
      _
    $region23: #{logit_fc_pallas.1} parent=1 // pred_check_branch
      %60 = sbr.rel (0) target = $region25
    $region24: #{logit_fc_pallas.1} parent=1 // pred_region
      %s61 = sadd.s32 0, 0
      %p62 = scmp.lt.s32.totalorder %s61, 0
      %s63 = scalar_select %p62, %s61, 0
      %s64 = smul.addr %s63, 8
      %s65 = smul.addr %s64, 4
      %s66 = scalar_lea.vmem %s5, %s65
      %s67 = sadd.s32 0, 0
    $region25: #{logit_fc_pallas.1} parent=1 // pred_fallthru
      _
    // Predicated region
    $region26: #{logit_fc_pallas.1} parent=1 // pred_check
      _
    $region27: #{logit_fc_pallas.1} parent=1 // pred_check_branch
      %69 = sbr.rel (0) target = $region29
    $region28: #{logit_fc_pallas.1} parent=1 // pred_region
      %s70 = sadd.s32 0, 0
      %p71 = scmp.lt.s32.totalorder %s70, 0
      %s72 = scalar_select %p71, %s70, 0
      %s73 = scalar_lea.vmem %s6, %s72
      %s74 = sadd.s32 0, 0
    $region29: #{logit_fc_pallas.1} parent=1 // pred_fallthru
      _
    // Predicated region
    $region30: #{logit_fc_pallas.1} parent=1 // pred_check
      _
    $region31: #{logit_fc_pallas.1} parent=1 // pred_check_branch
      %76 = sbr.rel (0) target = $region33
    $region32: #{logit_fc_pallas.1} parent=1 // pred_region
      %77 = dma.done [#allocation4], 256
    $region33: #{logit_fc_pallas.1} parent=1 // pred_fallthru
      _
    // Predicated region
    $region34: #{logit_fc_pallas.1} parent=1 // pred_check
      _
    $region35: #{logit_fc_pallas.1} parent=1 // pred_check_branch
      %79 = sbr.rel (0) target = $region37
    $region36: #{logit_fc_pallas.1} parent=1 // pred_region
      %80 = dma.done [#allocation6], 16
    $region37: #{logit_fc_pallas.1} parent=1 // pred_fallthru
      _
    // Predicated region
    $region38: #{logit_fc_pallas.1} parent=1 // pred_check
      _
    $region39: #{logit_fc_pallas.1} parent=1 // pred_check_branch
      %82 = sbr.rel (0) target = $region41
    $region40: #{logit_fc_pallas.1} parent=1 // pred_region
      %83 = dma.done [#allocation6], 16
    $region41: #{logit_fc_pallas.1} parent=1 // pred_fallthru
      _
    // Predicated region
    $region42: #{logit_fc_pallas.1} parent=1 // pred_check
      _
    $region43: #{logit_fc_pallas.1} parent=1 // pred_check_branch
      %85 = sbr.rel (0) target = $region45
    $region44: #{logit_fc_pallas.1} parent=1 // pred_region
      %86 = dma.done [#allocation9], 16
    $region45: #{logit_fc_pallas.1} parent=1 // pred_fallthru
      _
    %s87 = sadd.s32 0, 0
    %p88 = scmp.lt.s32.totalorder %s87, 0
    %s89 = scalar_select %p88, %s87, 0
    %s90 = smul.addr %s89, 8
    %s91 = smul.addr %s90, 4
    %s92 = scalar_lea.vmem %s5, %s91
    %s93 = sadd.s32 0, 0
    %p94 = scmp.lt.s32.totalorder %s93, 0
    %s95 = scalar_select %p94, %s93, 0
    %s96 = scalar_lea.vmem %s6, %s95
    %s97 = sadd.s32 0, 0
    %p98 = scmp.lt.s32.totalorder %s97, 0
    %s99 = scalar_select %p98, %s97, 0
    %s100 = smul.addr %s99, 8
    %s101 = scalar_lea.vmem %s7, %s100
    %s102 = sadd.s32 0, 0
    %p103 = scmp.lt.s32.totalorder %s102, 0
    %s104 = scalar_select %p103, %s102, 0
    %s105 = smul.addr %s104, 8
    %s106 = smul.addr %s105, 4
    %s107 = scalar_lea.vmem %s5, %s106
    %s108 = sadd.s32 0, 0
    %s109 = sadd.s32 0, 0
    %p110 = scmp.lt.s32.totalorder %s109, 0
    %s111 = scalar_select %p110, %s109, 0
    %s112 = scalar_lea.vmem %s6, %s111
    %s113 = sadd.s32 0, 0
    %s114 = sadd.s32 0, 0
    %p115 = scmp.lt.s32.totalorder %s114, 0
    %s116 = scalar_select %p115, %s114, 0
    %s117 = smul.addr %s116, 8
    %s118 = scalar_lea.vmem %s7, %s117
    %s119 = sadd.s32 0, 0
    %p121 = scmp.eq.s32.totalorder 0, 0
    // Predicated region
    $region46: #{logit_fc_pallas.1} parent=1 // pred_check
      %p122 = pneg %p121
    $region47: #{logit_fc_pallas.1} parent=1 // pred_check_branch
      %124 = sbr.rel (%p122) target = $region49
    $region48: #{logit_fc_pallas.1} parent=1 // pred_region
      %v125 = vld [vmem:[%s0] sm:$0xf]
      %v126 = vld [vmem:[%s0 + $0x4] sm:$0xf]
      %v127 = vld [vmem:[#allocation3] sm:$0xf]
      %v128 = vld [vmem:[#allocation3 + $0x4] sm:$0xf]
      %v129 = vld [vmem:[#allocation3 + $0x8] sm:$0xf]
      %v130 = vld [vmem:[#allocation3 + $0xc] sm:$0xf]
      %v131 = vld [vmem:[#allocation5] sm:$0x1]
      %v133 = vlaneseq
      %v134 = vshrl.u32 %v133, 7
      %v135 = vsub.s32 0, %v134
      %v136 = vrot.slane %v131, %v135
      %v140 = vunpack.c.l.b16 %v125
      %v141 = vunpack.c.l.b16 %v126
      %v142 = vpack.c.b16 %v141, %v140
      %v147 = vunpack.c.l.b16 %v127
      %v148 = vunpack.c.l.b16 %v128
      %v149 = vunpack.c.l.b16 %v129
      %v150 = vunpack.c.l.b16 %v130
      %v151 = vpack.c.b16 %v148, %v147
      %v152 = vpack.c.b16 %v150, %v149
      %vm155 = vcmask 261120
      %v157 = vsel %vm155, %v142, 0
      %159 = vmatprep.subr.bf16.mxu0 0
      %160 = vmatpush1.bf16.msra.mxu0 %v151
      %161 = vmatprep.subr.bf16.mxu0 0
      %162 = vmatpush1.bf16.msra.mxu0 %v152
      %163 = vmatprep.subr.bf16.mxu0 0
      %164 = vmatpush1.bf16.msra.mxu0 0
      %165 = vmatprep.subr.bf16.mxu0 0
      %166 = vmatpush1.bf16.msra.mxu0 0
      %167 = vmatprep.subr.bf16.mxu0 0
      %168 = vmatpush1.bf16.msra.mxu0 0
      %169 = vmatprep.subr.bf16.mxu0 0
      %170 = vmatpush1.bf16.msra.mxu0 0
      %171 = vmatprep.subr.bf16.mxu0 0
      %172 = vmatpush1.bf16.msra.mxu0 0
      %173 = vmatprep.subr.bf16.mxu0 0
      %174 = vmatpush1.bf16.msra.mxu0 0
      %175 = vmatprep.subr.bf16.mxu0 0
      %176 = vmatpush1.bf16.msra.mxu0 0
      %177 = vmatprep.subr.bf16.mxu0 0
      %178 = vmatpush1.bf16.msra.mxu0 0
      %179 = vmatprep.subr.bf16.mxu0 0
      %180 = vmatpush1.bf16.msra.mxu0 0
      %181 = vmatprep.subr.bf16.mxu0 0
      %182 = vmatpush1.bf16.msra.mxu0 0
      %183 = vmatprep.subr.bf16.mxu0 0
      %184 = vmatpush1.bf16.msra.mxu0 0
      %185 = vmatprep.subr.bf16.mxu0 0
      %186 = vmatpush1.bf16.msra.mxu0 0
      %187 = vmatprep.subr.bf16.mxu0 0
      %188 = vmatpush1.bf16.msra.mxu0 0
      %189 = vmatprep.subr.bf16.mxu0 0
      %190 = vmatpush1.bf16.msra.mxu0 0
      %191 = vmatprep.mubr.bf16.mxu0 0
      %192 = vmatmul.mubr.bf16.gmra.mrb[0].mxu0 %v157
      %v193 = vpop.f32.mrb[0].mxu0
      %v194 = vadd.f32 %v136, %v193
      %v195 = vpop.f32.mrb[0].mxu0
      %v196 = vpop.f32.mrb[0].mxu0
      %v197 = vadd.f32 %v136, %v196
      %v198 = vpop.f32.mrb[0].mxu0
      %199 = vdwg.mxu0
      %v200 = vmul.f32 %v194, 0.5
      %v201 = vmul.f32 %v197, 0.5
      %v202 = vmul.f32 %v194, 0.70710677
      %v203 = vmul.f32 %v197, 0.70710677
      %v204 = verf.f32.pop %v202
      %v205 = verf.f32.pop %v203
      %v206 = vadd.f32 %v204, 1.0
      %v207 = vadd.f32 %v205, 1.0
      %v208 = vmul.f32 %v200, %v206
      %v209 = vmul.f32 %v201, %v207
      %vm210 = vcmask 523264
      %v211 = vsel %vm210, %v208, 0.0
      %212 = vadd.xlane.f32.xlu0 %v211
      %v213 = vpop.xlane.xlu0 %212
      %v214 = vsel %vm210, %v209, 0.0
      %215 = vadd.xlane.f32.xlu0 %v214
      %v216 = vpop.xlane.xlu0 %215
      %v217 = vrcp.pop 64.0
      %v218 = vmul.f32 %v213, %v217
      %v219 = vmul.f32 %v216, %v217
      %v220 = vsub.f32 %v208, %v218
      %v221 = vsub.f32 %v209, %v219
      %v222 = vmul.f32 %v220, %v220
      %v223 = vmul.f32 %v221, %v221
      %v224 = vsel %vm210, %v222, 0.0
      %225 = vadd.xlane.f32.xlu0 %v224
      %v226 = vpop.xlane.xlu0 %225
      %v227 = vsel %vm210, %v223, 0.0
      %228 = vadd.xlane.f32.xlu0 %v227
      %v229 = vpop.xlane.xlu0 %228
      %v230 = vmul.f32 %v226, %v217
      %v231 = vmul.f32 %v229, %v217
      %v232 = vadd.f32 %v230, 1e-12
      %v233 = vadd.f32 %v231, 1e-12
      %v234 = vrsqrt.pop %v232
      %v235 = vrsqrt.pop %v233
      %v236 = vmul.f32 %v220, %v234
      %v237 = vmul.f32 %v221, %v235
      %v238 = vld [vmem:[#allocation7] sm:$0x1]
      %v240 = vlaneseq
      %v241 = vshrl.u32 %v240, 7
      %v242 = vsub.s32 0, %v241
      %v243 = vrot.slane %v238, %v242
      %v245 = vmul.f32 %v236, %v243
      %v246 = vmul.f32 %v237, %v243
      %v247 = vld [vmem:[#allocation8] sm:$0x1]
      %v249 = vlaneseq
      %v250 = vshrl.u32 %v249, 7
      %v251 = vsub.s32 0, %v250
      %v252 = vrot.slane %v247, %v251
      %v254 = vadd.f32 %v245, %v252
      %v255 = vadd.f32 %v246, %v252
      %v256 = vpack.c.bf16 %v255, %v254
      %257 = vst.msk [vmem:[#allocation2] sm:$0xff] %vm210, %v256
    $region49: #{logit_fc_pallas.1} parent=1 // pred_fallthru
      _
    %v258 = vld [vmem:[#allocation2] sm:$0xff]
    %v259 = vld [vmem:[%s107] sm:$0xf]
    %v260 = vld [vmem:[%s107 + $0x4] sm:$0xf]
    %v261 = vld [vmem:[%s107 + $0x8] sm:$0xf]
    %v262 = vld [vmem:[%s107 + $0xc] sm:$0xf]
    %v263 = vld [vmem:[%s107 + $0x10] sm:$0xf]
    %v264 = vld [vmem:[%s107 + $0x14] sm:$0xf]
    %v265 = vld [vmem:[%s107 + $0x18] sm:$0xf]
    %v266 = vld [vmem:[%s107 + $0x1c] sm:$0xf]
    %v267 = vld [vmem:[%s112] sm:$0x1]
    %v269 = vlaneseq
    %v270 = vshrl.u32 %v269, 7
    %v271 = vsub.s32 0, %v270
    %v272 = vrot.slane %v267, %v271
    %v282 = vunpack.c.l.b16 %v259
    %v283 = vunpack.c.l.b16 %v260
    %v284 = vunpack.c.l.b16 %v261
    %v285 = vunpack.c.l.b16 %v262
    %v286 = vunpack.c.l.b16 %v263
    %v287 = vunpack.c.l.b16 %v264
    %v288 = vunpack.c.l.b16 %v265
    %v289 = vunpack.c.l.b16 %v266
    %v290 = vpack.c.b16 %v283, %v282
    %v291 = vpack.c.b16 %v285, %v284
    %v292 = vpack.c.b16 %v287, %v286
    %v293 = vpack.c.b16 %v289, %v288
    %vm298 = vcmask 523264
    %v300 = vsel %vm298, %v258, 0
    %302 = vmatprep.subr.bf16.mxu0 0
    %303 = vmatpush1.bf16.msra.mxu0 %v290
    %304 = vmatprep.subr.bf16.mxu0 0
    %305 = vmatpush1.bf16.msra.mxu0 %v291
    %306 = vmatprep.subr.bf16.mxu0 0
    %307 = vmatpush1.bf16.msra.mxu0 %v292
    %308 = vmatprep.subr.bf16.mxu0 0
    %309 = vmatpush1.bf16.msra.mxu0 %v293
    %310 = vmatprep.subr.bf16.mxu0 0
    %311 = vmatpush1.bf16.msra.mxu0 0
    %312 = vmatprep.subr.bf16.mxu0 0
    %313 = vmatpush1.bf16.msra.mxu0 0
    %314 = vmatprep.subr.bf16.mxu0 0
    %315 = vmatpush1.bf16.msra.mxu0 0
    %316 = vmatprep.subr.bf16.mxu0 0
    %317 = vmatpush1.bf16.msra.mxu0 0
    %318 = vmatprep.subr.bf16.mxu0 0
    %319 = vmatpush1.bf16.msra.mxu0 0
    %320 = vmatprep.subr.bf16.mxu0 0
    %321 = vmatpush1.bf16.msra.mxu0 0
    %322 = vmatprep.subr.bf16.mxu0 0
    %323 = vmatpush1.bf16.msra.mxu0 0
    %324 = vmatprep.subr.bf16.mxu0 0
    %325 = vmatpush1.bf16.msra.mxu0 0
    %326 = vmatprep.subr.bf16.mxu0 0
    %327 = vmatpush1.bf16.msra.mxu0 0
    %328 = vmatprep.subr.bf16.mxu0 0
    %329 = vmatpush1.bf16.msra.mxu0 0
    %330 = vmatprep.subr.bf16.mxu0 0
    %331 = vmatpush1.bf16.msra.mxu0 0
    %332 = vmatprep.subr.bf16.mxu0 0
    %333 = vmatpush1.bf16.msra.mxu0 0
    %334 = vmatprep.mubr.bf16.mxu0 0
    %335 = vmatmul.mubr.bf16.gmra.mrb[0].mxu0 %v300
    %v336 = vpop.f32.mrb[0].mxu0
    %v337 = vadd.f32 %v272, %v336
    %v338 = vpop.f32.mrb[0].mxu0
    %v339 = vpop.f32.mrb[0].mxu0
    %v340 = vadd.f32 %v272, %v339
    %v341 = vpop.f32.mrb[0].mxu0
    %342 = vdwg.mxu0
    %343 = vst [vmem:[%s118] sm:$0xff] %v337
    %344 = vst [vmem:[%s118 + $0x8] sm:$0xff] %v340
    %s345 = sadd.s32 0, 0
    %p346 = scmp.lt.s32.totalorder %s345, 0
    %s347 = scalar_select %p346, %s345, 0
    %s348 = smul.addr %s347, 8
    %s349 = scalar_lea.vmem %s7, %s348
    // Predicated region
    $region50: #{logit_fc_pallas.1} parent=1 // pred_check
      _
    $region51: #{logit_fc_pallas.1} parent=1 // pred_check_branch
      %351 = sbr.rel (0) target = $region53
    $region52: #{logit_fc_pallas.1} parent=1 // pred_region
      %s352 = sadd.s32 0, 0
    $region53: #{logit_fc_pallas.1} parent=1 // pred_fallthru
      _
    // Predicated region
    $region54: #{logit_fc_pallas.1} parent=1 // pred_check
      _
    $region55: #{logit_fc_pallas.1} parent=1 // pred_check_branch
      %354 = sbr.rel (0) target = $region57
    $region56: #{logit_fc_pallas.1} parent=1 // pred_region
      %s355 = sadd.s32 0, 0
      %p356 = scmp.lt.s32.totalorder %s355, 0
      %s357 = scalar_select %p356, %s355, 0
      %s358 = smul.addr %s357, 8
      %s359 = scalar_lea.vmem %s7, %s358
    $region57: #{logit_fc_pallas.1} parent=1 // pred_fallthru
      _
    %360 = vsyncpa [#allocation4], 1
    %361 = vsyncpa [#allocation6], 1
    %362 = vsyncpa [#allocation9], 1

</llo_original>
